<compile_context>
chip_gen: v7x
topology: tpu7x:2x2x1
jax: 0.10.0
libtpu: 0.0.40
codegen_flags: <defaults>
</compile_context>

<pallas_src>
import math

import jax
import jax.numpy as jnp
from jax.experimental import pallas as pl
from jax.experimental.pallas import tpu as pltpu


# ----------------------------------------------------------------------------
# helpers
# ----------------------------------------------------------------------------

def _round_up(x, m):
    return ((x + m - 1) // m) * m


def _vmem_capacity_bytes():
    try:
        return int(pltpu.get_tpu_info().vmem_capacity_bytes)
    except Exception:
        return 64 * 1024 * 1024  # v7x-safe default


def _im2col3x3_cf(x_nchw):
    """NCHW -> (B, 9*C, H*W) same-padding 3x3 patches, tap-major / channel-minor rows."""
    B, C, H, W = x_nchw.shape
    xp = jnp.pad(x_nchw, ((0, 0), (0, 0), (1, 1), (1, 1)))
    taps = [xp[:, :, dy:dy + H, dx:dx + W].reshape(B, C, H * W)
            for dy in range(3) for dx in range(3)]
    return jnp.concatenate(taps, axis=1)


# ----------------------------------------------------------------------------
# Kernels
# ----------------------------------------------------------------------------

_TAPS = [(dy, dx) for dy in (-1, 0, 1) for dx in (-1, 0, 1)]


def _make_tap_kernel(W, HWp, P, add_noise):
    """Primary kernel: in-kernel 3x3 taps via static lane-offset slices of padded x.

    Refs per grid step (one batch element):
      x_ref     (1, C, HWp + 2P) bf16   flattened x, zero-padded left/right
      wf_ref    (1, 9, O, C)     bf16   folded (modulated+demodulated) conv weight
      cmask_ref (2, HWp)         bf16   row-wrap masks for dx=-1 / dx=+1 taps
      [noise_ref (1, 1, HWp) f32, sn_ref (1,1) f32 SMEM]   only when noise is given
      bias_ref  (O, 1)           f32
      out_ref   (1, O, HWp)      f32
    """

    def compute(x_ref, wf_ref, cmask_ref, noise_ref, sn_ref, bias_ref, out_ref):
        acc = None
        for k, (dy, dx) in enumerate(_TAPS):
            start = P + dy * W + dx                       # static offset
            tap = x_ref[0, :, start:start + HWp]          # (C, HWp) bf16
            if dx == -1:
                tap = tap * cmask_ref[0:1, :]
            elif dx == 1:
                tap = tap * cmask_ref[1:2, :]
            part = jnp.dot(wf_ref[0, k], tap, preferred_element_type=jnp.float32)
            acc = part if acc is None else acc + part     # (O, HWp) f32
        if add_noise:
            acc = acc + sn_ref[0, 0] * noise_ref[0]       # (1, HWp) bcast over channels
        acc = acc + bias_ref[...]                         # (O, 1)   bcast over lanes
        out_ref[0] = jnp.where(acc >= 0.0, acc, 0.2 * acc)

    if add_noise:
        def kernel(x_ref, wf_ref, cmask_ref, noise_ref, sn_ref, bias_ref, out_ref):
            compute(x_ref, wf_ref, cmask_ref, noise_ref, sn_ref, bias_ref, out_ref)
    else:
        def kernel(x_ref, wf_ref, cmask_ref, bias_ref, out_ref):
            compute(x_ref, wf_ref, cmask_ref, None, None, bias_ref, out_ref)
    return kernel


def _make_im2col_kernel(add_noise):
    """Fallback kernel (large shapes): single (O,9C)x(9C,hwt) dot on wrapper im2col."""

    def compute(cols_ref, wf_ref, noise_ref, sn_ref, bias_ref, out_ref):
        acc = jnp.dot(wf_ref[0], cols_ref[0], preferred_element_type=jnp.float32)
        if add_noise:
            acc = acc + sn_ref[0, 0] * noise_ref[0]
        acc = acc + bias_ref[...]
        out_ref[0] = jnp.where(acc >= 0.0, acc, 0.2 * acc)

    if add_noise:
        def kernel(cols_ref, wf_ref, noise_ref, sn_ref, bias_ref, out_ref):
            compute(cols_ref, wf_ref, noise_ref, sn_ref, bias_ref, out_ref)
    else:
        def kernel(cols_ref, wf_ref, bias_ref, out_ref):
            compute(cols_ref, wf_ref, None, None, bias_ref, out_ref)
    return kernel


# ----------------------------------------------------------------------------
# Wrapper
# ----------------------------------------------------------------------------

def _tap_path_vmem_estimate(C, O, HWp, HWtot, use_noise):
    bs = 2  # bf16
    blocks = (C * HWtot * bs            # x
              + 9 * O * C * bs          # folded weight
              + 2 * HWp * bs            # column masks
              + (HWp * 4 if use_noise else 0)
              + O * 4                   # bias
              + O * HWp * 4)            # output
    temps = 2 * C * HWp * bs + 2 * O * HWp * 4
    return 2 * blocks + temps           # 2x for double-buffered pipeline


def _im2col_path_vmem_estimate(C, O, hwt, use_noise):
    bs = 2
    blocks = (9 * C * hwt * bs + O * 9 * C * bs
              + (hwt * 4 if use_noise else 0) + O * 4 + O * hwt * 4)
    return 2 * blocks + O * hwt * 4


def style_block_apply(params, x, w_tok, noise=None, force_path=None):
    """x: (B, C, H, W) NCHW, w_tok: (B, style_num, style_dim), noise: (B, 1, H, W) or None."""
    B, C, H, W = x.shape
    O = C
    HW = H * W
    HWp = _round_up(HW, 128)            # lane-dense output even for tiny maps
    use_noise = noise is not None
    hi = jax.lax.Precision.HIGHEST

    # ---- style path + fold modulation & demodulation into the conv weight (tiny GEMMs,
    #      hoisted out of the kernel per perf review)
    s1 = jnp.matmul(w_tok.astype(jnp.float32), params["to_style_w"], precision=hi) \
        + params["to_style_b"]
    s2 = jnp.matmul(s1, params["to_scale_w"], precision=hi) + params["to_scale_b"]
    s = jnp.mean(s2, axis=1)                                          # (B, C)
    w = params["conv_w"].astype(jnp.float32)                          # (O, C, 3, 3)
    w_mod = w[None] * s[:, None, :, None, None]                       # (B, O, C, 3, 3)
    d = jax.lax.rsqrt(jnp.sum(w_mod * w_mod, axis=(2, 3, 4), keepdims=True) + 1e-8)
    w_fold = w_mod * d                                                # (B, O, C, 3, 3) f32

    bias = params["bias"].reshape(O, 1).astype(jnp.float32)
    sn = params["scale_noise"].reshape(1, 1).astype(jnp.float32)
    if use_noise:
        noise_flat = jnp.pad(noise.reshape(B, 1, HW).astype(jnp.float32),
                             ((0, 0), (0, 0), (0, HWp - HW)))

    # ---- VMEM-aware path / tile selection
    cap = _vmem_capacity_bytes()
    vmem_limit = min(cap * 3 // 4, 100 * 1024 * 1024)
    budget = int(vmem_limit * 0.9)

    P = _round_up(W + 1, 128)           # left/right zero pad (covers +/-(W+1) tap offsets)
    HWtot = HWp + 2 * P

    if force_path is not None:
        path = force_path
    else:
        path = "taps" if _tap_path_vmem_estimate(C, O, HWp, HWtot, use_noise) <= budget \
            else "im2col"

    cparams = dict(vmem_limit_bytes=vmem_limit)

    if path == "taps":
        # -------- primary path: in-kernel 3x3 taps, whole (padded) HW resident per batch
        x_pad = jnp.pad(x.reshape(B, C, HW).astype(jnp.float32),
                        ((0, 0), (0, 0), (P, HWtot - HW - P))).astype(jnp.bfloat16)
        wf_taps = jnp.transpose(w_fold, (0, 3, 4, 1, 2)).reshape(B, 9, O, C) \
            .astype(jnp.bfloat16)                                     # [b, ky*3+kx, o, c]
        col = jnp.arange(HWp, dtype=jnp.int32) % W
        cmask = jnp.stack([(col != 0), (col != (W - 1))]).astype(jnp.bfloat16)  # (2, HWp)

        in_specs = [
            pl.BlockSpec((1, C, HWtot), lambda b: (b, 0, 0)),
            pl.BlockSpec((1, 9, O, C), lambda b: (b, 0, 0, 0)),
            pl.BlockSpec((2, HWp), lambda b: (0, 0)),
        ]
        args = [x_pad, wf_taps, cmask]
        if use_noise:
            in_specs += [pl.BlockSpec((1, 1, HWp), lambda b: (b, 0, 0)),
                         pl.BlockSpec(memory_space=pltpu.MemorySpace.SMEM)]
            args += [noise_flat, sn]
        in_specs.append(pl.BlockSpec((O, 1), lambda b: (0, 0)))
        args.append(bias)

        out = pl.pallas_call(
            _make_tap_kernel(W, HWp, P, use_noise),
            out_shape=jax.ShapeDtypeStruct((B, O, HWp), jnp.float32),
            grid=(B,),
            in_specs=in_specs,
            out_specs=pl.BlockSpec((1, O, HWp), lambda b: (b, 0, 0)),
            compiler_params=pltpu.CompilerParams(
                dimension_semantics=("parallel",), **cparams),
        )(*args)

    else:
        # -------- fallback path: wrapper im2col, HW tiled in 128-multiples
        cols = _im2col3x3_cf(x.astype(jnp.float32))                   # (B, 9C, HW)
        cols = jnp.pad(cols, ((0, 0), (0, 0), (0, HWp - HW))).astype(jnp.bfloat16)
        wf_flat = jnp.transpose(w_fold, (0, 1, 3, 4, 2)).reshape(B, O, 9 * C) \
            .astype(jnp.bfloat16)

        hwt = 128
        for cand in (4096, 2048, 1024, 512, 256, 128):
            if cand <= HWp and HWp % cand == 0 and \
                    _im2col_path_vmem_estimate(C, O, cand, use_noise) <= budget:
                hwt = cand
                break
        n_tiles = HWp // hwt

        in_specs = [
            pl.BlockSpec((1, 9 * C, hwt), lambda b, t: (b, 0, t)),
            pl.BlockSpec((1, O, 9 * C), lambda b, t: (b, 0, 0)),
        ]
        args = [cols, wf_flat]
        if use_noise:
            in_specs += [pl.BlockSpec((1, 1, hwt), lambda b, t: (b, 0, t)),
                         pl.BlockSpec(memory_space=pltpu.MemorySpace.SMEM)]
            args += [noise_flat, sn]
        in_specs.append(pl.BlockSpec((O, 1), lambda b, t: (0, 0)))
        args.append(bias)

        out = pl.pallas_call(
            _make_im2col_kernel(use_noise),
            out_shape=jax.ShapeDtypeStruct((B, O, HWp), jnp.float32),
            grid=(B, n_tiles),
            in_specs=in_specs,
            out_specs=pl.BlockSpec((1, O, hwt), lambda b, t: (b, 0, t)),
            compiler_params=pltpu.CompilerParams(
                dimension_semantics=("parallel", "parallel"), **cparams),
        )(*args)

    return out[:, :, :HW].reshape(B, O, H, W)


# ----------------------------------------------------------------------------
# Parameters & pure-JAX reference (for correctness check)
# ----------------------------------------------------------------------------

def init_style_block_params(key, content_dim, style_dim):
    k1, k2, k3 = jax.random.split(key, 3)
    return dict(
        # EqualizedLinear(style_dim, style_dim, bias=1.0)
        to_style_w=jax.random.normal(k1, (style_dim, style_dim), jnp.float32)
        * (1.0 / math.sqrt(style_dim)),
        to_style_b=jnp.ones((style_dim,), jnp.float32),
        # StyleModulation projection style_dim -> content_dim (assumed equalized, bias=1.0)
        to_scale_w=jax.random.normal(k2, (style_dim, content_dim), jnp.float32)
        * (1.0 / math.sqrt(style_dim)),
        to_scale_b=jnp.ones((content_dim,), jnp.float32),
        # Equalized 3x3 conv weight (content_dim -> content_dim)
        conv_w=jax.random.normal(k3, (content_dim, content_dim, 3, 3), jnp.float32)
        * (1.0 / math.sqrt(content_dim * 9)),
        scale_noise=jnp.zeros((1,), jnp.float32),
        bias=jnp.zeros((content_dim,), jnp.float32),
    )


def style_block_reference(params, x, w_tok, noise):
    """Pure-JAX reference for the same forward semantics."""
    B, C, H, W = x.shape
    hi = jax.lax.Precision.HIGHEST
    s1 = jnp.matmul(w_tok, params["to_style_w"], precision=hi) + params["to_style_b"]
    s2 = jnp.matmul(s1, params["to_scale_w"], precision=hi) + params["to_scale_b"]
    s = jnp.mean(s2, axis=1)                                            # (B, C)
    w = params["conv_w"]                                                # (O, C, 3, 3)
    w_mod = w[None] * s[:, None, :, None, None]                         # (B, O, C, 3, 3)
    d = jax.lax.rsqrt(jnp.sum(w_mod * w_mod, axis=(2, 3, 4)) + 1e-8)    # (B, O)
    w_dem = w_mod * d[:, :, None, None, None]
    outs = []
    for b in range(B):
        outs.append(jax.lax.conv_general_dilated(
            x[b:b + 1], w_dem[b], window_strides=(1, 1), padding="SAME",
            dimension_numbers=("NCHW", "OIHW", "NCHW"), precision=hi)[0])
    out = jnp.stack(outs, axis=0)
    if noise is not None:
        out = out + params["scale_noise"][0] * noise
    out = out + params["bias"][None, :, None, None]
    return jnp.where(out >= 0.0, out, 0.2 * out)


# ----------------------------------------------------------------------------
# Main
# ----------------------------------------------------------------------------

if __name__ == "__main__":
    batch, content_dim, style_num, style_dim = 2, 8, 4, 16
    H = W = 16

    key = jax.random.PRNGKey(0)
    pkey, xkey, wkey, nkey = jax.random.split(key, 4)

    params = init_style_block_params(pkey, content_dim, style_dim)
    x = jax.random.normal(xkey, (batch, content_dim, H, W), jnp.float32)
    w_tok = jax.random.normal(wkey, (batch, style_num, style_dim), jnp.float32)
    noise = jax.random.normal(nkey, (batch, 1, H, W), jnp.float32)

    apply_fn = jax.jit(style_block_apply, static_argnames=("force_path",))

    def check(out, ref):
        err = float(jnp.max(jnp.abs(out - ref)))
        scale = float(jnp.max(jnp.abs(ref))) + 1e-6
        assert err <= 2e-2 * scale + 1e-4, (err, scale)

    # primary (in-kernel tap) path
    out = jax.block_until_ready(apply_fn(params, x, w_tok, noise))
    assert out.shape == (batch, content_dim, H, W), out.shape
    assert bool(jnp.all(jnp.isfinite(out)))
    ref = style_block_reference(params, x, w_tok, noise)
    check(out, ref)

    # large-shape im2col fallback path (forced) must agree too
    out_fb = jax.block_until_ready(apply_fn(params, x, w_tok, noise, force_path="im2col"))
    check(out_fb, ref)

    # noise=None path (noise inputs dropped from the kernel entirely)
    out_nn = jax.block_until_ready(apply_fn(params, x, w_tok, None))
    check(out_nn, style_block_reference(params, x, w_tok, None))

    print("KERNEL_OK")
</pallas_src>

<mosaic_0001>
module attributes {stable_mosaic.version = 11 : i64} {
  func.func @kernel(%arg0: i32, %arg1: memref<1x8x512xbf16, #tpu.memory_space<vmem>>, %arg2: memref<1x9x8x8xbf16, #tpu.memory_space<vmem>>, %arg3: memref<2x256xbf16, #tpu.memory_space<vmem>>, %arg4: memref<1x1x256xf32, #tpu.memory_space<vmem>>, %arg5: memref<1x1xf32, #tpu.memory_space<smem>>, %arg6: memref<8x1xf32, #tpu.memory_space<vmem>>, %arg7: memref<1x8x256xf32, #tpu.memory_space<vmem>>) attributes {dimension_semantics = [#tpu.dimension_semantics<parallel>], iteration_bounds = array<i64: 2>, scalar_prefetch = 0 : i64, scratch_operands = 0 : i64, tpu.core_type = #tpu.core_type<tc>, window_params = [{transform_indices = @transform_0, window_bounds = array<i64: 1, 8, 512>}, {transform_indices = @transform_1, window_bounds = array<i64: 1, 9, 8, 8>}, {pipeline_mode = #tpu.pipeline_mode<synchronous>, transform_indices = @transform_2, window_bounds = array<i64: 2, 256>}, {transform_indices = @transform_3, window_bounds = array<i64: 1, 1, 256>}, {transform_indices = @transform_4, window_bounds = array<i64: 1, 1>}, {pipeline_mode = #tpu.pipeline_mode<synchronous>, transform_indices = @transform_5, window_bounds = array<i64: 8, 1>}, {transform_indices = @transform_6, window_bounds = array<i64: 1, 8, 256>}]} {
    %c0 = arith.constant 0 : index
    %c0_0 = arith.constant 0 : index
    %c111 = arith.constant 111 : index
    %0 = vector.load %arg1[%c0, %c0_0, %c111] : memref<1x8x512xbf16, #tpu.memory_space<vmem>>, vector<1x8x256xbf16>
    %1 = vector.shape_cast %0 : vector<1x8x256xbf16> to vector<8x256xbf16>
    %c0_1 = arith.constant 0 : index
    %c0_2 = arith.constant 0 : index
    %2 = vector.load %arg3[%c0_1, %c0_2] : memref<2x256xbf16, #tpu.memory_space<vmem>>, vector<1x256xbf16>
    %3 = vector.broadcast %2 : vector<1x256xbf16> to vector<8x256xbf16>
    %4 = arith.mulf %1, %3 : vector<8x256xbf16>
    %c0_3 = arith.constant 0 : index
    %c0_4 = arith.constant 0 : index
    %c0_5 = arith.constant 0 : index
    %c0_6 = arith.constant 0 : index
    %5 = vector.load %arg2[%c0_3, %c0_4, %c0_5, %c0_6] : memref<1x9x8x8xbf16, #tpu.memory_space<vmem>>, vector<1x1x8x8xbf16>
    %6 = vector.shape_cast %5 : vector<1x1x8x8xbf16> to vector<8x8xbf16>
    %cst = arith.constant dense<0.000000e+00> : vector<8x256xf32>
    %7 = tpu.matmul %6, %4, %cst {dimension_numbers = #tpu.dot_dimension_numbers<[1], [0], [0], [1], [0, 0, 1, 1], [], []>} : vector<8x8xbf16>, vector<8x256xbf16>, vector<8x256xf32> -> vector<8x256xf32>
    %c0_7 = arith.constant 0 : index
    %c0_8 = arith.constant 0 : index
    %c112 = arith.constant 112 : index
    %8 = vector.load %arg1[%c0_7, %c0_8, %c112] : memref<1x8x512xbf16, #tpu.memory_space<vmem>>, vector<1x8x256xbf16>
    %9 = vector.shape_cast %8 : vector<1x8x256xbf16> to vector<8x256xbf16>
    %c0_9 = arith.constant 0 : index
    %c1 = arith.constant 1 : index
    %c0_10 = arith.constant 0 : index
    %c0_11 = arith.constant 0 : index
    %10 = vector.load %arg2[%c0_9, %c1, %c0_10, %c0_11] : memref<1x9x8x8xbf16, #tpu.memory_space<vmem>>, vector<1x1x8x8xbf16>
    %11 = vector.shape_cast %10 : vector<1x1x8x8xbf16> to vector<8x8xbf16>
    %cst_12 = arith.constant dense<0.000000e+00> : vector<8x256xf32>
    %12 = tpu.matmul %11, %9, %cst_12 {dimension_numbers = #tpu.dot_dimension_numbers<[1], [0], [0], [1], [0, 0, 1, 1], [], []>} : vector<8x8xbf16>, vector<8x256xbf16>, vector<8x256xf32> -> vector<8x256xf32>
    %13 = arith.addf %7, %12 : vector<8x256xf32>
    %c0_13 = arith.constant 0 : index
    %c0_14 = arith.constant 0 : index
    %c113 = arith.constant 113 : index
    %14 = vector.load %arg1[%c0_13, %c0_14, %c113] : memref<1x8x512xbf16, #tpu.memory_space<vmem>>, vector<1x8x256xbf16>
    %15 = vector.shape_cast %14 : vector<1x8x256xbf16> to vector<8x256xbf16>
    %c1_15 = arith.constant 1 : index
    %c0_16 = arith.constant 0 : index
    %16 = vector.load %arg3[%c1_15, %c0_16] : memref<2x256xbf16, #tpu.memory_space<vmem>>, vector<1x256xbf16>
    %17 = vector.broadcast %16 : vector<1x256xbf16> to vector<8x256xbf16>
    %18 = arith.mulf %15, %17 : vector<8x256xbf16>
    %c0_17 = arith.constant 0 : index
    %c2 = arith.constant 2 : index
    %c0_18 = arith.constant 0 : index
    %c0_19 = arith.constant 0 : index
    %19 = vector.load %arg2[%c0_17, %c2, %c0_18, %c0_19] : memref<1x9x8x8xbf16, #tpu.memory_space<vmem>>, vector<1x1x8x8xbf16>
    %20 = vector.shape_cast %19 : vector<1x1x8x8xbf16> to vector<8x8xbf16>
    %cst_20 = arith.constant dense<0.000000e+00> : vector<8x256xf32>
    %21 = tpu.matmul %20, %18, %cst_20 {dimension_numbers = #tpu.dot_dimension_numbers<[1], [0], [0], [1], [0, 0, 1, 1], [], []>} : vector<8x8xbf16>, vector<8x256xbf16>, vector<8x256xf32> -> vector<8x256xf32>
    %22 = arith.addf %13, %21 : vector<8x256xf32>
    %c0_21 = arith.constant 0 : index
    %c0_22 = arith.constant 0 : index
    %c127 = arith.constant 127 : index
    %23 = vector.load %arg1[%c0_21, %c0_22, %c127] : memref<1x8x512xbf16, #tpu.memory_space<vmem>>, vector<1x8x256xbf16>
    %24 = vector.shape_cast %23 : vector<1x8x256xbf16> to vector<8x256xbf16>
    %c0_23 = arith.constant 0 : index
    %c0_24 = arith.constant 0 : index
    %25 = vector.load %arg3[%c0_23, %c0_24] : memref<2x256xbf16, #tpu.memory_space<vmem>>, vector<1x256xbf16>
    %26 = vector.broadcast %25 : vector<1x256xbf16> to vector<8x256xbf16>
    %27 = arith.mulf %24, %26 : vector<8x256xbf16>
    %c0_25 = arith.constant 0 : index
    %c3 = arith.constant 3 : index
    %c0_26 = arith.constant 0 : index
    %c0_27 = arith.constant 0 : index
    %28 = vector.load %arg2[%c0_25, %c3, %c0_26, %c0_27] : memref<1x9x8x8xbf16, #tpu.memory_space<vmem>>, vector<1x1x8x8xbf16>
    %29 = vector.shape_cast %28 : vector<1x1x8x8xbf16> to vector<8x8xbf16>
    %cst_28 = arith.constant dense<0.000000e+00> : vector<8x256xf32>
    %30 = tpu.matmul %29, %27, %cst_28 {dimension_numbers = #tpu.dot_dimension_numbers<[1], [0], [0], [1], [0, 0, 1, 1], [], []>} : vector<8x8xbf16>, vector<8x256xbf16>, vector<8x256xf32> -> vector<8x256xf32>
    %31 = arith.addf %22, %30 : vector<8x256xf32>
    %c0_29 = arith.constant 0 : index
    %c0_30 = arith.constant 0 : index
    %c128 = arith.constant 128 : index
    %32 = vector.load %arg1[%c0_29, %c0_30, %c128] : memref<1x8x512xbf16, #tpu.memory_space<vmem>>, vector<1x8x256xbf16>
    %33 = vector.shape_cast %32 : vector<1x8x256xbf16> to vector<8x256xbf16>
    %c0_31 = arith.constant 0 : index
    %c4 = arith.constant 4 : index
    %c0_32 = arith.constant 0 : index
    %c0_33 = arith.constant 0 : index
    %34 = vector.load %arg2[%c0_31, %c4, %c0_32, %c0_33] : memref<1x9x8x8xbf16, #tpu.memory_space<vmem>>, vector<1x1x8x8xbf16>
    %35 = vector.shape_cast %34 : vector<1x1x8x8xbf16> to vector<8x8xbf16>
    %cst_34 = arith.constant dense<0.000000e+00> : vector<8x256xf32>
    %36 = tpu.matmul %35, %33, %cst_34 {dimension_numbers = #tpu.dot_dimension_numbers<[1], [0], [0], [1], [0, 0, 1, 1], [], []>} : vector<8x8xbf16>, vector<8x256xbf16>, vector<8x256xf32> -> vector<8x256xf32>
    %37 = arith.addf %31, %36 : vector<8x256xf32>
    %c0_35 = arith.constant 0 : index
    %c0_36 = arith.constant 0 : index
    %c129 = arith.constant 129 : index
    %38 = vector.load %arg1[%c0_35, %c0_36, %c129] : memref<1x8x512xbf16, #tpu.memory_space<vmem>>, vector<1x8x256xbf16>
    %39 = vector.shape_cast %38 : vector<1x8x256xbf16> to vector<8x256xbf16>
    %c1_37 = arith.constant 1 : index
    %c0_38 = arith.constant 0 : index
    %40 = vector.load %arg3[%c1_37, %c0_38] : memref<2x256xbf16, #tpu.memory_space<vmem>>, vector<1x256xbf16>
    %41 = vector.broadcast %40 : vector<1x256xbf16> to vector<8x256xbf16>
    %42 = arith.mulf %39, %41 : vector<8x256xbf16>
    %c0_39 = arith.constant 0 : index
    %c5 = arith.constant 5 : index
    %c0_40 = arith.constant 0 : index
    %c0_41 = arith.constant 0 : index
    %43 = vector.load %arg2[%c0_39, %c5, %c0_40, %c0_41] : memref<1x9x8x8xbf16, #tpu.memory_space<vmem>>, vector<1x1x8x8xbf16>
    %44 = vector.shape_cast %43 : vector<1x1x8x8xbf16> to vector<8x8xbf16>
    %cst_42 = arith.constant dense<0.000000e+00> : vector<8x256xf32>
    %45 = tpu.matmul %44, %42, %cst_42 {dimension_numbers = #tpu.dot_dimension_numbers<[1], [0], [0], [1], [0, 0, 1, 1], [], []>} : vector<8x8xbf16>, vector<8x256xbf16>, vector<8x256xf32> -> vector<8x256xf32>
    %46 = arith.addf %37, %45 : vector<8x256xf32>
    %c0_43 = arith.constant 0 : index
    %c0_44 = arith.constant 0 : index
    %c143 = arith.constant 143 : index
    %47 = vector.load %arg1[%c0_43, %c0_44, %c143] : memref<1x8x512xbf16, #tpu.memory_space<vmem>>, vector<1x8x256xbf16>
    %48 = vector.shape_cast %47 : vector<1x8x256xbf16> to vector<8x256xbf16>
    %c0_45 = arith.constant 0 : index
    %c0_46 = arith.constant 0 : index
    %49 = vector.load %arg3[%c0_45, %c0_46] : memref<2x256xbf16, #tpu.memory_space<vmem>>, vector<1x256xbf16>
    %50 = vector.broadcast %49 : vector<1x256xbf16> to vector<8x256xbf16>
    %51 = arith.mulf %48, %50 : vector<8x256xbf16>
    %c0_47 = arith.constant 0 : index
    %c6 = arith.constant 6 : index
    %c0_48 = arith.constant 0 : index
    %c0_49 = arith.constant 0 : index
    %52 = vector.load %arg2[%c0_47, %c6, %c0_48, %c0_49] : memref<1x9x8x8xbf16, #tpu.memory_space<vmem>>, vector<1x1x8x8xbf16>
    %53 = vector.shape_cast %52 : vector<1x1x8x8xbf16> to vector<8x8xbf16>
    %cst_50 = arith.constant dense<0.000000e+00> : vector<8x256xf32>
    %54 = tpu.matmul %53, %51, %cst_50 {dimension_numbers = #tpu.dot_dimension_numbers<[1], [0], [0], [1], [0, 0, 1, 1], [], []>} : vector<8x8xbf16>, vector<8x256xbf16>, vector<8x256xf32> -> vector<8x256xf32>
    %55 = arith.addf %46, %54 : vector<8x256xf32>
    %c0_51 = arith.constant 0 : index
    %c0_52 = arith.constant 0 : index
    %c144 = arith.constant 144 : index
    %56 = vector.load %arg1[%c0_51, %c0_52, %c144] : memref<1x8x512xbf16, #tpu.memory_space<vmem>>, vector<1x8x256xbf16>
    %57 = vector.shape_cast %56 : vector<1x8x256xbf16> to vector<8x256xbf16>
    %c0_53 = arith.constant 0 : index
    %c7 = arith.constant 7 : index
    %c0_54 = arith.constant 0 : index
    %c0_55 = arith.constant 0 : index
    %58 = vector.load %arg2[%c0_53, %c7, %c0_54, %c0_55] : memref<1x9x8x8xbf16, #tpu.memory_space<vmem>>, vector<1x1x8x8xbf16>
    %59 = vector.shape_cast %58 : vector<1x1x8x8xbf16> to vector<8x8xbf16>
    %cst_56 = arith.constant dense<0.000000e+00> : vector<8x256xf32>
    %60 = tpu.matmul %59, %57, %cst_56 {dimension_numbers = #tpu.dot_dimension_numbers<[1], [0], [0], [1], [0, 0, 1, 1], [], []>} : vector<8x8xbf16>, vector<8x256xbf16>, vector<8x256xf32> -> vector<8x256xf32>
    %61 = arith.addf %55, %60 : vector<8x256xf32>
    %c0_57 = arith.constant 0 : index
    %c0_58 = arith.constant 0 : index
    %c145 = arith.constant 145 : index
    %62 = vector.load %arg1[%c0_57, %c0_58, %c145] : memref<1x8x512xbf16, #tpu.memory_space<vmem>>, vector<1x8x256xbf16>
    %63 = vector.shape_cast %62 : vector<1x8x256xbf16> to vector<8x256xbf16>
    %c1_59 = arith.constant 1 : index
    %c0_60 = arith.constant 0 : index
    %64 = vector.load %arg3[%c1_59, %c0_60] : memref<2x256xbf16, #tpu.memory_space<vmem>>, vector<1x256xbf16>
    %65 = vector.broadcast %64 : vector<1x256xbf16> to vector<8x256xbf16>
    %66 = arith.mulf %63, %65 : vector<8x256xbf16>
    %c0_61 = arith.constant 0 : index
    %c8 = arith.constant 8 : index
    %c0_62 = arith.constant 0 : index
    %c0_63 = arith.constant 0 : index
    %67 = vector.load %arg2[%c0_61, %c8, %c0_62, %c0_63] : memref<1x9x8x8xbf16, #tpu.memory_space<vmem>>, vector<1x1x8x8xbf16>
    %68 = vector.shape_cast %67 : vector<1x1x8x8xbf16> to vector<8x8xbf16>
    %cst_64 = arith.constant dense<0.000000e+00> : vector<8x256xf32>
    %69 = tpu.matmul %68, %66, %cst_64 {dimension_numbers = #tpu.dot_dimension_numbers<[1], [0], [0], [1], [0, 0, 1, 1], [], []>} : vector<8x8xbf16>, vector<8x256xbf16>, vector<8x256xf32> -> vector<8x256xf32>
    %70 = arith.addf %61, %69 : vector<8x256xf32>
    %c0_65 = arith.constant 0 : index
    %c0_66 = arith.constant 0 : index
    %71 = memref.load %arg5[%c0_65, %c0_66] : memref<1x1xf32, #tpu.memory_space<smem>>
    %c0_67 = arith.constant 0 : index
    %c0_68 = arith.constant 0 : index
    %c0_69 = arith.constant 0 : index
    %72 = vector.load %arg4[%c0_67, %c0_68, %c0_69] : memref<1x1x256xf32, #tpu.memory_space<vmem>>, vector<1x1x256xf32>
    %73 = vector.shape_cast %72 : vector<1x1x256xf32> to vector<1x256xf32>
    %74 = vector.broadcast %71 : f32 to vector<1x256xf32>
    %75 = arith.mulf %74, %73 : vector<1x256xf32>
    %76 = vector.broadcast %75 : vector<1x256xf32> to vector<8x256xf32>
    %77 = arith.addf %70, %76 : vector<8x256xf32>
    %c0_70 = arith.constant 0 : index
    %c0_71 = arith.constant 0 : index
    %78 = vector.load %arg6[%c0_70, %c0_71] : memref<8x1xf32, #tpu.memory_space<vmem>>, vector<8x1xf32>
    %79 = vector.broadcast %78 : vector<8x1xf32> to vector<8x256xf32>
    %80 = arith.addf %77, %79 : vector<8x256xf32>
    %cst_72 = arith.constant 0.000000e+00 : f32
    %81 = vector.broadcast %cst_72 : f32 to vector<8x256xf32>
    %82 = arith.cmpf oge, %80, %81 : vector<8x256xf32>
    %cst_73 = arith.constant 2.000000e-01 : f32
    %83 = vector.broadcast %cst_73 : f32 to vector<8x256xf32>
    %84 = arith.mulf %83, %80 : vector<8x256xf32>
    %85 = arith.select %82, %80, %84 : vector<8x256xi1>, vector<8x256xf32>
    %c0_74 = arith.constant 0 : index
    %c0_75 = arith.constant 0 : index
    %c0_76 = arith.constant 0 : index
    %86 = vector.load %arg7[%c0_74, %c0_75, %c0_76] : memref<1x8x256xf32, #tpu.memory_space<vmem>>, vector<1x8x256xf32>
    %87 = vector.shape_cast %86 : vector<1x8x256xf32> to vector<8x256xf32>
    %88 = vector.shape_cast %85 : vector<8x256xf32> to vector<1x8x256xf32>
    tpu.vector_store %arg7[%c0_74, %c0_75, %c0_76], %88 {strides = array<i32>} : memref<1x8x256xf32, #tpu.memory_space<vmem>>, vector<1x8x256xf32>,
    return
  }
  func.func @transform_0(%arg0: i32) -> (i32, i32, i32) {
    %c0_i32 = arith.constant 0 : i32
    %c0_i32_0 = arith.constant 0 : i32
    %c0_i32_1 = arith.constant 0 : i32
    return %arg0, %c0_i32, %c0_i32_0 : i32, i32, i32
  }
  func.func @transform_1(%arg0: i32) -> (i32, i32, i32, i32) {
    %c0_i32 = arith.constant 0 : i32
    %c0_i32_0 = arith.constant 0 : i32
    %c0_i32_1 = arith.constant 0 : i32
    %c0_i32_2 = arith.constant 0 : i32
    return %arg0, %c0_i32, %c0_i32_0, %c0_i32_1 : i32, i32, i32, i32
  }
  func.func @transform_2(%arg0: i32) -> (i32, i32) {
    %c0_i32 = arith.constant 0 : i32
    %c0_i32_0 = arith.constant 0 : i32
    %c0_i32_1 = arith.constant 0 : i32
    return %c0_i32, %c0_i32_0 : i32, i32
  }
  func.func @transform_3(%arg0: i32) -> (i32, i32, i32) {
    %c0_i32 = arith.constant 0 : i32
    %c0_i32_0 = arith.constant 0 : i32
    %c0_i32_1 = arith.constant 0 : i32
    return %arg0, %c0_i32, %c0_i32_0 : i32, i32, i32
  }
  func.func @transform_4(%arg0: i32) -> (i32, i32) {
    %c0_i32 = arith.constant 0 : i32
    %c0_i32_0 = arith.constant 0 : i32
    %c0_i32_1 = arith.constant 0 : i32
    return %c0_i32, %c0_i32_0 : i32, i32
  }
  func.func @transform_5(%arg0: i32) -> (i32, i32) {
    %c0_i32 = arith.constant 0 : i32
    %c0_i32_0 = arith.constant 0 : i32
    %c0_i32_1 = arith.constant 0 : i32
    return %c0_i32, %c0_i32_0 : i32, i32
  }
  func.func @transform_6(%arg0: i32) -> (i32, i32, i32) {
    %c0_i32 = arith.constant 0 : i32
    %c0_i32_0 = arith.constant 0 : i32
    %c0_i32_1 = arith.constant 0 : i32
    return %arg0, %c0_i32, %c0_i32_0 : i32, i32, i32
  }
}

</mosaic_0001>

<llo_original>
// kernel: style_block_apply.1
$region0: #{style_block_apply.1}
  #allocation0 [shape = 'u32[]', space=smem, size = 0x4, offset = 0x4, fixed_abs, tag = 'smem constant byte address 0x4 - core index']
  #allocation1 [shape = 'u32[144,128]{1,0:T(1,128)}', space=vmem, size = 0x12000, scoped, tag = 'internal scratch']
  #allocation2 [shape = 'f32[1,1]{1,0:T(1,128)S(6)}', space=smem, size = 0x200, scoped, tag = 'scoped memory for style_block_apply.1']
  %s0 = inlined_call_operand.vmem [shape: bf16[2,8,512], index: 0, kind: input, shape index: {}]
  %s1 = inlined_call_operand.vmem [shape: bf16[2,9,8,8], index: 1, kind: input, shape index: {}]
  %s2 = inlined_call_operand.vmem [shape: bf16[2,256], index: 2, kind: input, shape index: {}]
  %s3 = inlined_call_operand.vmem [shape: f32[2,1,256], index: 3, kind: input, shape index: {}]
  %s4 = inlined_call_operand.<no memory space> [shape: f32[1,1], index: 4, kind: input, shape index: {}]
  %s5 = inlined_call_operand.vmem [shape: f32[8,1], index: 5, kind: input, shape index: {}]
  %s6 = inlined_call_operand.vmem [shape: f32[2,8,256], index: 6, kind: output, shape index: {}]
  %s7 = sld [smem:[#allocation0]]
  $region57: #{style_block_apply.1} parent=0
    _
  %s9 = ssub.s32 1, %s7
  %s10 = scalar_select 0, %s9, %s7
  %11 = sst [smem:[#allocation2]] %s4
  loop: start=0, step=1, limit=4
  $region2: #{style_block_apply.1} parent=0 // loop_pre_header
    _
  $region3: #{style_block_apply.1} parent=0 // loop_header
    %s13 = sphi 0, %s17
    %p14 = scmp.ge.s32.totalorder %s13, 4
    %s23 = sphi 0, %s25
    %s26 = sphi 0, %s23
    %s27 = sphi 0, %s26
    %s43 = sphi 0, %s27
    %s49 = sphi 0, %s51
    %s52 = sphi 0, %s49
    %s53 = sphi 0, %s52
    %s69 = sphi 0, %s53
    %s73 = sphi 0, %s73
    %s75 = sphi 0, %s73
    %s76 = sphi 0, %s75
    %s90 = sphi 0, %s76
    %s96 = sphi 0, %s98
    %s99 = sphi 0, %s96
    %s100 = sphi 0, %s99
    %s116 = sphi 0, %s100
    %s120 = sphi 0, %s120
    %s122 = sphi 0, %s120
    %s123 = sphi 0, %s122
    %s137 = sphi 0, %s123
    %s141 = sphi 0, %s141
    %s143 = sphi 0, %s141
    %s144 = sphi 0, %s143
    %s158 = sphi 0, %s144
    %s164 = sphi 0, %s166
    %s167 = sphi 0, %s164
    %s168 = sphi 0, %s167
    %s184 = sphi 0, %s168
  $region4: #{style_block_apply.1} parent=0 // loop_header_branch
    %16 = sbr.rel (%p14) target = $region8
  $region5: #{style_block_apply.1} parent=0 // loop_body
    %s18 = ssub.s32 %s13, 1
    %s19 = ssub.s32 %s13, 2
    %s20 = sadd.s32 %s13, 1
    %s21 = ssub.s32 %s13, %s20
    %p22 = scmp.eq.s32.totalorder %s21, 0
    %s24 = sadd.s32 %s23, 1
    %s25 = scalar_select %p22, %s23, %s24
    %p28 = pneg %p22
    %p29 = scmp.eq.s32.totalorder %s13, 1
    %p30 = por %p28, %p29
    %p31 = scmp.ne.s32.totalorder %s23, %s26
    %p32 = scmp.eq.s32.totalorder %s13, 0
    %p33 = por %p31, %p32
    %p34 = scmp.ne.s32.totalorder %s23, %s26
    %p35 = scmp.eq.s32.totalorder %s18, 1
    %p36 = por %p34, %p35
    %p37 = scmp.ne.s32.totalorder %s26, %s27
    %p38 = scmp.eq.s32.totalorder %s18, 0
    %p39 = por %p37, %p38
    %p40 = scmp.ne.s32.totalorder %s26, %s27
    %p41 = scmp.eq.s32.totalorder %s19, 1
    %p42 = por %p40, %p41
    %p44 = scmp.ne.s32.totalorder %s27, %s43
    %p45 = scmp.eq.s32.totalorder %s19, 0
    %p46 = por %p44, %p45
    %s47 = ssub.s32 %s13, %s20
    %p48 = scmp.eq.s32.totalorder %s47, 0
    %s50 = sadd.s32 %s49, 1
    %s51 = scalar_select %p48, %s49, %s50
    %p54 = pneg %p48
    %p55 = scmp.eq.s32.totalorder %s13, 1
    %p56 = por %p54, %p55
    %p57 = scmp.ne.s32.totalorder %s49, %s52
    %p58 = scmp.eq.s32.totalorder %s13, 0
    %p59 = por %p57, %p58
    %p60 = scmp.ne.s32.totalorder %s49, %s52
    %p61 = scmp.eq.s32.totalorder %s18, 1
    %p62 = por %p60, %p61
    %p63 = scmp.ne.s32.totalorder %s52, %s53
    %p64 = scmp.eq.s32.totalorder %s18, 0
    %p65 = por %p63, %p64
    %p66 = scmp.ne.s32.totalorder %s52, %s53
    %p67 = scmp.eq.s32.totalorder %s19, 1
    %p68 = por %p66, %p67
    %p70 = scmp.ne.s32.totalorder %s53, %s69
    %p71 = scmp.eq.s32.totalorder %s19, 0
    %p72 = por %p70, %p71
    %s74 = sadd.s32 %s73, 1
    %p77 = scmp.eq.s32.totalorder %s13, 1
    %p78 = scmp.ne.s32.totalorder %s73, %s75
    %p79 = scmp.eq.s32.totalorder %s13, 0
    %p80 = por %p78, %p79
    %p81 = scmp.ne.s32.totalorder %s73, %s75
    %p82 = scmp.eq.s32.totalorder %s18, 1
    %p83 = por %p81, %p82
    %p84 = scmp.ne.s32.totalorder %s75, %s76
    %p85 = scmp.eq.s32.totalorder %s18, 0
    %p86 = por %p84, %p85
    %p87 = scmp.ne.s32.totalorder %s75, %s76
    %p88 = scmp.eq.s32.totalorder %s19, 1
    %p89 = por %p87, %p88
    %p91 = scmp.ne.s32.totalorder %s76, %s90
    %p92 = scmp.eq.s32.totalorder %s19, 0
    %p93 = por %p91, %p92
    %s94 = ssub.s32 %s13, %s20
    %p95 = scmp.eq.s32.totalorder %s94, 0
    %s97 = sadd.s32 %s96, 1
    %s98 = scalar_select %p95, %s96, %s97
    %p101 = pneg %p95
    %p102 = scmp.eq.s32.totalorder %s13, 1
    %p103 = por %p101, %p102
    %p104 = scmp.ne.s32.totalorder %s96, %s99
    %p105 = scmp.eq.s32.totalorder %s13, 0
    %p106 = por %p104, %p105
    %p107 = scmp.ne.s32.totalorder %s96, %s99
    %p108 = scmp.eq.s32.totalorder %s18, 1
    %p109 = por %p107, %p108
    %p110 = scmp.ne.s32.totalorder %s99, %s100
    %p111 = scmp.eq.s32.totalorder %s18, 0
    %p112 = por %p110, %p111
    %p113 = scmp.ne.s32.totalorder %s99, %s100
    %p114 = scmp.eq.s32.totalorder %s19, 1
    %p115 = por %p113, %p114
    %p117 = scmp.ne.s32.totalorder %s100, %s116
    %p118 = scmp.eq.s32.totalorder %s19, 0
    %p119 = por %p117, %p118
    %s121 = sadd.s32 %s120, 1
    %p124 = scmp.eq.s32.totalorder %s13, 1
    %p125 = scmp.ne.s32.totalorder %s120, %s122
    %p126 = scmp.eq.s32.totalorder %s13, 0
    %p127 = por %p125, %p126
    %p128 = scmp.ne.s32.totalorder %s120, %s122
    %p129 = scmp.eq.s32.totalorder %s18, 1
    %p130 = por %p128, %p129
    %p131 = scmp.ne.s32.totalorder %s122, %s123
    %p132 = scmp.eq.s32.totalorder %s18, 0
    %p133 = por %p131, %p132
    %p134 = scmp.ne.s32.totalorder %s122, %s123
    %p135 = scmp.eq.s32.totalorder %s19, 1
    %p136 = por %p134, %p135
    %p138 = scmp.ne.s32.totalorder %s123, %s137
    %p139 = scmp.eq.s32.totalorder %s19, 0
    %p140 = por %p138, %p139
    %s142 = sadd.s32 %s141, 1
    %p145 = scmp.eq.s32.totalorder %s13, 1
    %p146 = scmp.ne.s32.totalorder %s141, %s143
    %p147 = scmp.eq.s32.totalorder %s13, 0
    %p148 = por %p146, %p147
    %p149 = scmp.ne.s32.totalorder %s141, %s143
    %p150 = scmp.eq.s32.totalorder %s18, 1
    %p151 = por %p149, %p150
    %p152 = scmp.ne.s32.totalorder %s143, %s144
    %p153 = scmp.eq.s32.totalorder %s18, 0
    %p154 = por %p152, %p153
    %p155 = scmp.ne.s32.totalorder %s143, %s144
    %p156 = scmp.eq.s32.totalorder %s19, 1
    %p157 = por %p155, %p156
    %p159 = scmp.ne.s32.totalorder %s144, %s158
    %p160 = scmp.eq.s32.totalorder %s19, 0
    %p161 = por %p159, %p160
    %s162 = ssub.s32 %s13, %s20
    %p163 = scmp.eq.s32.totalorder %s162, 0
    %s165 = sadd.s32 %s164, 1
    %s166 = scalar_select %p163, %s164, %s165
    %p169 = pneg %p163
    %p170 = scmp.eq.s32.totalorder %s13, 1
    %p171 = por %p169, %p170
    %p172 = scmp.ne.s32.totalorder %s164, %s167
    %p173 = scmp.eq.s32.totalorder %s13, 0
    %p174 = por %p172, %p173
    %p175 = scmp.ne.s32.totalorder %s164, %s167
    %p176 = scmp.eq.s32.totalorder %s18, 1
    %p177 = por %p175, %p176
    %p178 = scmp.ne.s32.totalorder %s167, %s168
    %p179 = scmp.eq.s32.totalorder %s18, 0
    %p180 = por %p178, %p179
    %p181 = scmp.ne.s32.totalorder %s167, %s168
    %p182 = scmp.eq.s32.totalorder %s19, 1
    %p183 = por %p181, %p182
    %p185 = scmp.ne.s32.totalorder %s168, %s184
    %p186 = scmp.eq.s32.totalorder %s19, 0
    %p187 = por %p185, %p186
    %p188 = scmp.le.s32.totalorder 1, %s13
    %p189 = scmp.lt.s32.totalorder %s13, 3
    %p190 = pnand %p188, %p189
    %p191 = pneg %p190
    // Predicated region
    $region9: #{style_block_apply.1} parent=5 // pred_check
      _
    $region10: #{style_block_apply.1} parent=5 // pred_check_branch
      %193 = sbr.rel (%p190) target = $region12
    $region11: #{style_block_apply.1} parent=5 // pred_region
      %s194 = ssub.s32 %s13, 1
      // Predicated region
      $region13: #{style_block_apply.1} parent=11 // pred_check
        %p195 = pneg %p86
      $region14: #{style_block_apply.1} parent=11 // pred_check_branch
        %197 = sbr.rel (%p195) target = $region16
      $region15: #{style_block_apply.1} parent=11 // pred_region
        _
      $region16: #{style_block_apply.1} parent=11 // pred_fallthru
        _
      // Predicated region
      $region17: #{style_block_apply.1} parent=11 // pred_check
        %p198 = pneg %p133
      $region18: #{style_block_apply.1} parent=11 // pred_check_branch
        %200 = sbr.rel (%p198) target = $region20
      $region19: #{style_block_apply.1} parent=11 // pred_region
        _
      $region20: #{style_block_apply.1} parent=11 // pred_fallthru
        _
      // Predicated region
      $region21: #{style_block_apply.1} parent=11 // pred_check
        %p201 = pneg %p154
      $region22: #{style_block_apply.1} parent=11 // pred_check_branch
        %203 = sbr.rel (%p201) target = $region24
      $region23: #{style_block_apply.1} parent=11 // pred_region
        _
      $region24: #{style_block_apply.1} parent=11 // pred_fallthru
        _
    $region12: #{style_block_apply.1} parent=5 // pred_fallthru
      _
    %p204 = scmp.lt.s32.totalorder %s13, 2
    // Predicated region
    $region25: #{style_block_apply.1} parent=5 // pred_check
      %p205 = pneg %p204
    $region26: #{style_block_apply.1} parent=5 // pred_check_branch
      %207 = sbr.rel (%p205) target = $region28
    $region27: #{style_block_apply.1} parent=5 // pred_region
      // Predicated region
      $region29: #{style_block_apply.1} parent=27 // pred_check
        %p208 = pneg %p33
      $region30: #{style_block_apply.1} parent=27 // pred_check_branch
        %210 = sbr.rel (%p208) target = $region32
      $region31: #{style_block_apply.1} parent=27 // pred_region
        %p211 = scmp.lt.s32.totalorder %s13, 1
        %s212 = scalar_select %p211, %s13, 1
        %s213 = smul.addr %s212, 4
        %s214 = smul.addr %s213, 4
        %s215 = scalar_lea.vmem %s0, %s214
      $region32: #{style_block_apply.1} parent=27 // pred_fallthru
        _
      // Predicated region
      $region33: #{style_block_apply.1} parent=27 // pred_check
        %p216 = pneg %p59
      $region34: #{style_block_apply.1} parent=27 // pred_check_branch
        %218 = sbr.rel (%p216) target = $region36
      $region35: #{style_block_apply.1} parent=27 // pred_region
        %p219 = scmp.lt.s32.totalorder %s13, 1
        %s220 = scalar_select %p219, %s13, 1
        %s221 = smul.addr %s220, 9
        %s222 = smul.addr %s221, 4
        %s223 = scalar_lea.vmem %s1, %s222
      $region36: #{style_block_apply.1} parent=27 // pred_fallthru
        _
      // Predicated region
      $region37: #{style_block_apply.1} parent=27 // pred_check
        %p224 = pneg %p106
      $region38: #{style_block_apply.1} parent=27 // pred_check_branch
        %226 = sbr.rel (%p224) target = $region40
      $region39: #{style_block_apply.1} parent=27 // pred_region
        %p227 = scmp.lt.s32.totalorder %s13, 1
        %s228 = scalar_select %p227, %s13, 1
        %s229 = smul.addr %s228, 2
        %s230 = scalar_lea.vmem %s3, %s229
      $region40: #{style_block_apply.1} parent=27 // pred_fallthru
        _
    $region28: #{style_block_apply.1} parent=5 // pred_fallthru
      _
    %p231 = scmp.le.s32.totalorder 1, %s13
    %p232 = scmp.lt.s32.totalorder %s13, 3
    %p233 = pnand %p231, %p232
    %p234 = pneg %p233
    // Predicated region
    $region41: #{style_block_apply.1} parent=5 // pred_check
      _
    $region42: #{style_block_apply.1} parent=5 // pred_check_branch
      %236 = sbr.rel (%p233) target = $region44
    $region43: #{style_block_apply.1} parent=5 // pred_region
      %s237 = ssub.s32 %s13, 1
      %p238 = scmp.lt.s32.totalorder %s18, 1
      %s239 = scalar_select %p238, %s18, 1
      %s240 = smul.addr %s239, 4
      %s241 = smul.addr %s240, 4
      %s242 = scalar_lea.vmem %s0, %s241
      %p243 = pneg %p39
      %p244 = pneg %p36
      %p245 = scmp.lt.s32.totalorder %s18, 1
      %s246 = scalar_select %p245, %s18, 1
      %s247 = smul.addr %s246, 9
      %s248 = smul.addr %s247, 4
      %s249 = scalar_lea.vmem %s1, %s248
      %p250 = pneg %p65
      %p251 = pneg %p62
      %p252 = pneg %p86
      %p253 = pneg %p83
      %p254 = scmp.lt.s32.totalorder %s18, 1
      %s255 = scalar_select %p254, %s18, 1
      %s256 = smul.addr %s255, 2
      %s257 = scalar_lea.vmem %s3, %s256
      %p258 = pneg %p112
      %p259 = pneg %p109
      %p260 = pneg %p133
      %p261 = pneg %p130
      %p262 = pneg %p154
      %p263 = pneg %p151
      %p264 = pneg %p180
      %p265 = pneg %p177
      %p266 = scmp.lt.s32.totalorder %s18, 1
      %s267 = scalar_select %p266, %s18, 1
      %s268 = smul.addr %s267, 2
      %s269 = smul.addr %s268, 8
      %s270 = scalar_lea.vmem %s6, %s269
      %p271 = scmp.lt.s32.totalorder %s18, 1
      %s272 = scalar_select %p271, %s18, 1
      %s273 = smul.addr %s272, 4
      %s274 = smul.addr %s273, 4
      %s275 = scalar_lea.vmem %s0, %s274
      %p276 = scmp.lt.s32.totalorder %s18, 1
      %s277 = scalar_select %p276, %s18, 1
      %s278 = smul.addr %s277, 9
      %s279 = smul.addr %s278, 4
      %s280 = scalar_lea.vmem %s1, %s279
      %p281 = scmp.lt.s32.totalorder %s18, 1
      %s282 = scalar_select %p281, %s18, 1
      %s283 = smul.addr %s282, 2
      %s284 = scalar_lea.vmem %s3, %s283
      %p285 = scmp.lt.s32.totalorder %s18, 1
      %s286 = scalar_select %p285, %s18, 1
      %s287 = smul.addr %s286, 2
      %s288 = smul.addr %s287, 8
      %s289 = scalar_lea.vmem %s6, %s288
      %v291 = vld [vmem:[%s275] sm:$0xff]
      %v292 = vld [vmem:[%s275 + $0x8] sm:$0xf]
      %v293 = vld [vmem:[%s2] sm:$0x3]
      %v296 = vunpack.c.l.s4 1966171168
      %v297 = vunpack.c.0.s8 %v296
      %v298 = vlaneseq
      %v299 = vshrl.u32 %v298, 7
      %v300 = vsub.s32 %v297, %v299
      %v301 = vrot.slane %v293, %v300
      %v302 = vcombine.high %v301, %v301
      %v304 = vunpack.c.l.s4 1966171168
      %v305 = vunpack.c.0.s8 %v304
      %v306 = vlaneseq
      %v307 = vshrl.u32 %v306, 7
      %v308 = vsub.s32 %v305, %v307
      %v309 = vrot.slane %v301, %v308
      %v311 = vunpack.c.l.s4 1966171168
      %v312 = vunpack.c.0.s8 %v311
      %v313 = vlaneseq
      %v314 = vshrl.u32 %v313, 7
      %v315 = vsub.s32 %v312, %v314
      %v316 = vrot.slane %v302, %v315
      %v318 = vpack.i.b16 %v309, %v309
      %v320 = vlaneseq
      %v321 = vshrl.u32 %v320, 7
      %v322 = vsub.s32 0, %v321
      %v323 = vrot.slane %v318, %v322
      %v325 = vpack.i.b16 %v316, %v316
      %v327 = vlaneseq
      %v328 = vshrl.u32 %v327, 7
      %v329 = vsub.s32 0, %v328
      %v330 = vrot.slane %v325, %v329
      %v333 = vunpack.c.l.b16 %v323
      %v334 = vunpack.c.l.b16 %v330
      %v335 = vpack.c.b16 %v334, %v333
      %336 = vrot.lane.b32.xlu0 %v335, 111
      %v337 = vpop.permute.xlu0 %336
      %v338 = vrot.slane %v337, 4
      %vm339 = vcmask 908288
      %v340 = vsel %vm339, %v338, %v337
      %v343 = vmul.bf16 %v291, %v340
      %v344 = vmul.bf16 %v292, %v338
      %v345 = vld [vmem:[%s280] sm:$0xf]
      %s346 = scalar_lea.vmem %s280, 4
      %v347 = vld [vmem:[%s346] sm:$0xf]
      %v350 = vunpack.c.l.b16 %v291
      %v351 = vunpack.c.h.b16 %v291
      %v352 = vunpack.c.l.b16 %v292
      %v353 = vpack.c.b16 %v350, %v350
      %v354 = vpack.c.b16 %v351, %v351
      %v355 = vpack.c.b16 %v352, %v352
      %356 = vrot.lane.b32.xlu0 %v353, 16
      %v357 = vpop.permute.xlu0 %356
      %358 = vrot.lane.b32.xlu0 %v354, 16
      %v359 = vpop.permute.xlu0 %358
      %360 = vrot.lane.b32.xlu0 %v355, 16
      %v361 = vpop.permute.xlu0 %360
      %vm362 = vcmask 130048
      %v363 = vsel %vm362, %v357, %v359
      %v364 = vsel %vm362, %v359, %v361
      %vm365 = vcmask 64512
      %v367 = vsel %vm365, %v347, 0
      %vm369 = vcmask 1043456
      %v371 = vsel %vm369, %v363, 0
      %v374 = vsel %vm369, %v364, 0
      %376 = vmatprep.subr.bf16.mxu0 %v374
      %377 = vmatpush1.bf16.msra.mxu0 %v371
      %378 = vmatprep.subr.bf16.mxu0 0
      %379 = vmatpush1.bf16.msra.mxu0 0
      %380 = vmatprep.subr.bf16.mxu0 0
      %381 = vmatpush1.bf16.msra.mxu0 0
      %382 = vmatprep.subr.bf16.mxu0 0
      %383 = vmatpush1.bf16.msra.mxu0 0
      %384 = vmatprep.subr.bf16.mxu0 0
      %385 = vmatpush1.bf16.msra.mxu0 0
      %386 = vmatprep.subr.bf16.mxu0 0
      %387 = vmatpush1.bf16.msra.mxu0 0
      %388 = vmatprep.subr.bf16.mxu0 0
      %389 = vmatpush1.bf16.msra.mxu0 0
      %390 = vmatprep.subr.bf16.mxu0 0
      %391 = vmatpush1.bf16.msra.mxu0 0
      %392 = vmatprep.subr.bf16.mxu0 0
      %393 = vmatpush1.bf16.msra.mxu0 0
      %394 = vmatprep.subr.bf16.mxu0 0
      %395 = vmatpush1.bf16.msra.mxu0 0
      %396 = vmatprep.subr.bf16.mxu0 0
      %397 = vmatpush1.bf16.msra.mxu0 0
      %398 = vmatprep.subr.bf16.mxu0 0
      %399 = vmatpush1.bf16.msra.mxu0 0
      %400 = vmatprep.subr.bf16.mxu0 0
      %401 = vmatpush1.bf16.msra.mxu0 0
      %402 = vmatprep.subr.bf16.mxu0 0
      %403 = vmatpush1.bf16.msra.mxu0 0
      %404 = vmatprep.subr.bf16.mxu0 0
      %405 = vmatpush1.bf16.msra.mxu0 0
      %406 = vmatprep.subr.bf16.mxu0 0
      %407 = vmatpush1.bf16.msra.mxu0 0
      %408 = vmatprep.mubr.bf16.mxu0 0
      %409 = vmatmul.mubr.bf16.gmra.mrb[0].mxu0 %v367
      %v410 = vpop.f32.mrb[0].mxu0
      %v411 = vadd.f32 0.0, %v410
      %v412 = vpop.f32.mrb[0].mxu0
      %v413 = vadd.f32 0.0, %v412
      %v414 = vpop.f32.mrb[0].mxu0
      %v415 = vpop.f32.mrb[0].mxu0
      %416 = vdwg.mxu0
      %v419 = vunpack.c.l.b16 %v343
      %v420 = vunpack.c.h.b16 %v343
      %v421 = vunpack.c.l.b16 %v344
      %v422 = vpack.c.b16 %v419, %v419
      %v423 = vpack.c.b16 %v420, %v420
      %v424 = vpack.c.b16 %v421, %v421
      %425 = vrot.lane.b32.xlu0 %v422, 17
      %v426 = vpop.permute.xlu0 %425
      %427 = vrot.lane.b32.xlu0 %v423, 17
      %v428 = vpop.permute.xlu0 %427
      %429 = vrot.lane.b32.xlu0 %v424, 17
      %v430 = vpop.permute.xlu0 %429
      %vm431 = vcmask 138240
      %v432 = vsel %vm431, %v426, %v428
      %v433 = vsel %vm431, %v428, %v430
      %v435 = vsel %vm365, %v345, 0
      %v438 = vsel %vm369, %v432, 0
      %v441 = vsel %vm369, %v433, 0
      %443 = vmatprep.subr.bf16.mxu0 %v441
      %444 = vmatpush1.bf16.msra.mxu0 %v438
      %445 = vmatprep.subr.bf16.mxu0 0
      %446 = vmatpush1.bf16.msra.mxu0 0
      %447 = vmatprep.subr.bf16.mxu0 0
      %448 = vmatpush1.bf16.msra.mxu0 0
      %449 = vmatprep.subr.bf16.mxu0 0
      %450 = vmatpush1.bf16.msra.mxu0 0
      %451 = vmatprep.subr.bf16.mxu0 0
      %452 = vmatpush1.bf16.msra.mxu0 0
      %453 = vmatprep.subr.bf16.mxu0 0
      %454 = vmatpush1.bf16.msra.mxu0 0
      %455 = vmatprep.subr.bf16.mxu0 0
      %456 = vmatpush1.bf16.msra.mxu0 0
      %457 = vmatprep.subr.bf16.mxu0 0
      %458 = vmatpush1.bf16.msra.mxu0 0
      %459 = vmatprep.subr.bf16.mxu0 0
      %460 = vmatpush1.bf16.msra.mxu0 0
      %461 = vmatprep.subr.bf16.mxu0 0
      %462 = vmatpush1.bf16.msra.mxu0 0
      %463 = vmatprep.subr.bf16.mxu0 0
      %464 = vmatpush1.bf16.msra.mxu0 0
      %465 = vmatprep.subr.bf16.mxu0 0
      %466 = vmatpush1.bf16.msra.mxu0 0
      %467 = vmatprep.subr.bf16.mxu0 0
      %468 = vmatpush1.bf16.msra.mxu0 0
      %469 = vmatprep.subr.bf16.mxu0 0
      %470 = vmatpush1.bf16.msra.mxu0 0
      %471 = vmatprep.subr.bf16.mxu0 0
      %472 = vmatpush1.bf16.msra.mxu0 0
      %473 = vmatprep.subr.bf16.mxu0 0
      %474 = vmatpush1.bf16.msra.mxu0 0
      %475 = vmatprep.mubr.bf16.mxu0 0
      %476 = vmatmul.mubr.bf16.gmra.mrb[0].mxu0 %v435
      %v477 = vpop.f32.mrb[0].mxu0
      %v478 = vadd.f32 %v411, %v477
      %v479 = vpop.f32.mrb[0].mxu0
      %v480 = vadd.f32 %v413, %v479
      %v481 = vpop.f32.mrb[0].mxu0
      %v482 = vpop.f32.mrb[0].mxu0
      %483 = vdwg.mxu0
      %v484 = vld [vmem:[%s2] sm:$0x3]
      %v487 = vunpack.c.l.s4 1966171168
      %v488 = vunpack.c.0.s8 %v487
      %v489 = vlaneseq
      %v490 = vshrl.u32 %v489, 7
      %v491 = vsub.s32 %v488, %v490
      %v492 = vrot.slane %v484, %v491
      %v493 = vcombine.high %v492, %v492
      %v495 = vunpack.c.l.s4 1966171168
      %v496 = vunpack.c.0.s8 %v495
      %v497 = vlaneseq
      %v498 = vshrl.u32 %v497, 7
      %v499 = vsub.s32 %v496, %v498
      %v500 = vrot.slane %v492, %v499
      %v502 = vunpack.c.l.s4 1966171168
      %v503 = vunpack.c.0.s8 %v502
      %v504 = vlaneseq
      %v505 = vshrl.u32 %v504, 7
      %v506 = vsub.s32 %v503, %v505
      %v507 = vrot.slane %v493, %v506
      %v509 = vshrl.u32 %v500, 16
      %v510 = vpack.i.b16 %v509, %v509
      %v512 = vlaneseq
      %v513 = vshrl.u32 %v512, 7
      %v514 = vsub.s32 0, %v513
      %v515 = vrot.slane %v510, %v514
      %v517 = vshrl.u32 %v507, 16
      %v518 = vpack.i.b16 %v517, %v517
      %v520 = vlaneseq
      %v521 = vshrl.u32 %v520, 7
      %v522 = vsub.s32 0, %v521
      %v523 = vrot.slane %v518, %v522
      %v526 = vunpack.c.l.b16 %v515
      %v527 = vunpack.c.l.b16 %v523
      %v528 = vpack.c.b16 %v527, %v526
      %529 = vrot.lane.b32.xlu0 %v528, 113
      %v530 = vpop.permute.xlu0 %529
      %v531 = vrot.slane %v530, 4
      %vm532 = vcmask 924672
      %v533 = vsel %vm532, %v531, %v530
      %v536 = vmul.bf16 %v291, %v533
      %v537 = vmul.bf16 %v292, %v531
      %s538 = scalar_lea.vmem %s280, 8
      %v539 = vld [vmem:[%s538] sm:$0xf]
      %v542 = vunpack.c.l.b16 %v536
      %v543 = vunpack.c.h.b16 %v536
      %v544 = vunpack.c.l.b16 %v537
      %v545 = vpack.c.b16 %v542, %v542
      %v546 = vpack.c.b16 %v543, %v543
      %v547 = vpack.c.b16 %v544, %v544
      %548 = vrot.lane.b32.xlu0 %v545, 15
      %v549 = vpop.permute.xlu0 %548
      %550 = vrot.lane.b32.xlu0 %v546, 15
      %v551 = vpop.permute.xlu0 %550
      %552 = vrot.lane.b32.xlu0 %v547, 15
      %v553 = vpop.permute.xlu0 %552
      %vm554 = vcmask 121856
      %v555 = vsel %vm554, %v549, %v551
      %v556 = vsel %vm554, %v551, %v553
      %v558 = vsel %vm365, %v539, 0
      %v561 = vsel %vm369, %v555, 0
      %v564 = vsel %vm369, %v556, 0
      %566 = vmatprep.subr.bf16.mxu0 %v564
      %567 = vmatpush1.bf16.msra.mxu0 %v561
      %568 = vmatprep.subr.bf16.mxu0 0
      %569 = vmatpush1.bf16.msra.mxu0 0
      %570 = vmatprep.subr.bf16.mxu0 0
      %571 = vmatpush1.bf16.msra.mxu0 0
      %572 = vmatprep.subr.bf16.mxu0 0
      %573 = vmatpush1.bf16.msra.mxu0 0
      %574 = vmatprep.subr.bf16.mxu0 0
      %575 = vmatpush1.bf16.msra.mxu0 0
      %576 = vmatprep.subr.bf16.mxu0 0
      %577 = vmatpush1.bf16.msra.mxu0 0
      %578 = vmatprep.subr.bf16.mxu0 0
      %579 = vmatpush1.bf16.msra.mxu0 0
      %580 = vmatprep.subr.bf16.mxu0 0
      %581 = vmatpush1.bf16.msra.mxu0 0
      %582 = vmatprep.subr.bf16.mxu0 0
      %583 = vmatpush1.bf16.msra.mxu0 0
      %584 = vmatprep.subr.bf16.mxu0 0
      %585 = vmatpush1.bf16.msra.mxu0 0
      %586 = vmatprep.subr.bf16.mxu0 0
      %587 = vmatpush1.bf16.msra.mxu0 0
      %588 = vmatprep.subr.bf16.mxu0 0
      %589 = vmatpush1.bf16.msra.mxu0 0
      %590 = vmatprep.subr.bf16.mxu0 0
      %591 = vmatpush1.bf16.msra.mxu0 0
      %592 = vmatprep.subr.bf16.mxu0 0
      %593 = vmatpush1.bf16.msra.mxu0 0
      %594 = vmatprep.subr.bf16.mxu0 0
      %595 = vmatpush1.bf16.msra.mxu0 0
      %596 = vmatprep.subr.bf16.mxu0 0
      %597 = vmatpush1.bf16.msra.mxu0 0
      %598 = vmatprep.mubr.bf16.mxu0 0
      %599 = vmatmul.mubr.bf16.gmra.mrb[0].mxu0 %v558
      %v600 = vpop.f32.mrb[0].mxu0
      %v601 = vadd.f32 0.0, %v600
      %v602 = vpop.f32.mrb[0].mxu0
      %v603 = vadd.f32 0.0, %v602
      %v604 = vpop.f32.mrb[0].mxu0
      %v605 = vpop.f32.mrb[0].mxu0
      %606 = vdwg.mxu0
      %v607 = vadd.f32 %v478, %v601
      %v608 = vadd.f32 %v480, %v603
      %v609 = vld [vmem:[%s275] sm:$0xff]
      %v610 = vld [vmem:[%s275 + $0x8] sm:$0xf]
      %611 = vrot.lane.b32.xlu0 %v335, 127
      %v612 = vpop.permute.xlu0 %611
      %v613 = vrot.slane %v612, 4
      %vm614 = vcmask 1039360
      %v615 = vsel %vm614, %v613, %v612
      %v618 = vmul.bf16 %v609, %v615
      %v619 = vmul.bf16 %v610, %v613
      %s620 = scalar_lea.vmem %s280, 12
      %v621 = vld [vmem:[%s620] sm:$0xf]
      %v624 = vunpack.c.l.b16 %v618
      %v625 = vunpack.c.h.b16 %v618
      %v626 = vunpack.c.l.b16 %v619
      %v627 = vpack.c.b16 %v624, %v624
      %v628 = vpack.c.b16 %v625, %v625
      %v629 = vpack.c.b16 %v626, %v626
      %630 = vrot.lane.b32.xlu0 %v627, 1
      %v631 = vpop.permute.xlu0 %630
      %632 = vrot.lane.b32.xlu0 %v628, 1
      %v633 = vpop.permute.xlu0 %632
      %634 = vrot.lane.b32.xlu0 %v629, 1
      %v635 = vpop.permute.xlu0 %634
      %vm636 = vcmask 7168
      %v637 = vsel %vm636, %v631, %v633
      %v638 = vsel %vm636, %v633, %v635
      %v640 = vsel %vm365, %v621, 0
      %v643 = vsel %vm369, %v637, 0
      %v646 = vsel %vm369, %v638, 0
      %648 = vmatprep.subr.bf16.mxu0 %v646
      %649 = vmatpush1.bf16.msra.mxu0 %v643
      %650 = vmatprep.subr.bf16.mxu0 0
      %651 = vmatpush1.bf16.msra.mxu0 0
      %652 = vmatprep.subr.bf16.mxu0 0
      %653 = vmatpush1.bf16.msra.mxu0 0
      %654 = vmatprep.subr.bf16.mxu0 0
      %655 = vmatpush1.bf16.msra.mxu0 0
      %656 = vmatprep.subr.bf16.mxu0 0
      %657 = vmatpush1.bf16.msra.mxu0 0
      %658 = vmatprep.subr.bf16.mxu0 0
      %659 = vmatpush1.bf16.msra.mxu0 0
      %660 = vmatprep.subr.bf16.mxu0 0
      %661 = vmatpush1.bf16.msra.mxu0 0
      %662 = vmatprep.subr.bf16.mxu0 0
      %663 = vmatpush1.bf16.msra.mxu0 0
      %664 = vmatprep.subr.bf16.mxu0 0
      %665 = vmatpush1.bf16.msra.mxu0 0
      %666 = vmatprep.subr.bf16.mxu0 0
      %667 = vmatpush1.bf16.msra.mxu0 0
      %668 = vmatprep.subr.bf16.mxu0 0
      %669 = vmatpush1.bf16.msra.mxu0 0
      %670 = vmatprep.subr.bf16.mxu0 0
      %671 = vmatpush1.bf16.msra.mxu0 0
      %672 = vmatprep.subr.bf16.mxu0 0
      %673 = vmatpush1.bf16.msra.mxu0 0
      %674 = vmatprep.subr.bf16.mxu0 0
      %675 = vmatpush1.bf16.msra.mxu0 0
      %676 = vmatprep.subr.bf16.mxu0 0
      %677 = vmatpush1.bf16.msra.mxu0 0
      %678 = vmatprep.subr.bf16.mxu0 0
      %679 = vmatpush1.bf16.msra.mxu0 0
      %680 = vmatprep.mubr.bf16.mxu0 0
      %681 = vmatmul.mubr.bf16.gmra.mrb[0].mxu0 %v640
      %v682 = vpop.f32.mrb[0].mxu0
      %v683 = vadd.f32 0.0, %v682
      %v684 = vpop.f32.mrb[0].mxu0
      %v685 = vadd.f32 0.0, %v684
      %v686 = vpop.f32.mrb[0].mxu0
      %v687 = vpop.f32.mrb[0].mxu0
      %688 = vdwg.mxu0
      %v689 = vadd.f32 %v607, %v683
      %v690 = vadd.f32 %v608, %v685
      %v691 = vld [vmem:[%s275 + $0x4] sm:$0xff]
      %s692 = scalar_lea.vmem %s280, 16
      %v693 = vld [vmem:[%s692] sm:$0xf]
      %v695 = vunpack.c.l.b16 %v691
      %v696 = vunpack.c.h.b16 %v691
      %v697 = vpack.c.b16 %v695, %v695
      %v698 = vpack.c.b16 %v696, %v696
      %v700 = vsel %vm365, %v693, 0
      %v703 = vsel %vm369, %v697, 0
      %v706 = vsel %vm369, %v698, 0
      %708 = vmatprep.subr.bf16.mxu0 %v706
      %709 = vmatpush1.bf16.msra.mxu0 %v703
      %710 = vmatprep.subr.bf16.mxu0 0
      %711 = vmatpush1.bf16.msra.mxu0 0
      %712 = vmatprep.subr.bf16.mxu0 0
      %713 = vmatpush1.bf16.msra.mxu0 0
      %714 = vmatprep.subr.bf16.mxu0 0
      %715 = vmatpush1.bf16.msra.mxu0 0
      %716 = vmatprep.subr.bf16.mxu0 0
      %717 = vmatpush1.bf16.msra.mxu0 0
      %718 = vmatprep.subr.bf16.mxu0 0
      %719 = vmatpush1.bf16.msra.mxu0 0
      %720 = vmatprep.subr.bf16.mxu0 0
      %721 = vmatpush1.bf16.msra.mxu0 0
      %722 = vmatprep.subr.bf16.mxu0 0
      %723 = vmatpush1.bf16.msra.mxu0 0
      %724 = vmatprep.subr.bf16.mxu0 0
      %725 = vmatpush1.bf16.msra.mxu0 0
      %726 = vmatprep.subr.bf16.mxu0 0
      %727 = vmatpush1.bf16.msra.mxu0 0
      %728 = vmatprep.subr.bf16.mxu0 0
      %729 = vmatpush1.bf16.msra.mxu0 0
      %730 = vmatprep.subr.bf16.mxu0 0
      %731 = vmatpush1.bf16.msra.mxu0 0
      %732 = vmatprep.subr.bf16.mxu0 0
      %733 = vmatpush1.bf16.msra.mxu0 0
      %734 = vmatprep.subr.bf16.mxu0 0
      %735 = vmatpush1.bf16.msra.mxu0 0
      %736 = vmatprep.subr.bf16.mxu0 0
      %737 = vmatpush1.bf16.msra.mxu0 0
      %738 = vmatprep.subr.bf16.mxu0 0
      %739 = vmatpush1.bf16.msra.mxu0 0
      %740 = vmatprep.mubr.bf16.mxu0 0
      %741 = vmatmul.mubr.bf16.gmra.mrb[0].mxu0 %v700
      %v742 = vpop.f32.mrb[0].mxu0
      %v743 = vadd.f32 0.0, %v742
      %v744 = vpop.f32.mrb[0].mxu0
      %v745 = vadd.f32 0.0, %v744
      %v746 = vpop.f32.mrb[0].mxu0
      %v747 = vpop.f32.mrb[0].mxu0
      %748 = vdwg.mxu0
      %v749 = vadd.f32 %v689, %v743
      %v750 = vadd.f32 %v690, %v745
      %v751 = vld [vmem:[%s275 + $0x4] sm:$0xff]
      %v752 = vld [vmem:[%s275 + $0xc] sm:$0xf]
      %753 = vrot.lane.b32.xlu0 %v528, 1
      %v754 = vpop.permute.xlu0 %753
      %v755 = vrot.slane %v754, 4
      %v756 = vsel %vm636, %v755, %v754
      %v759 = vmul.bf16 %v751, %v756
      %v760 = vmul.bf16 %v752, %v755
      %s761 = scalar_lea.vmem %s280, 20
      %v762 = vld [vmem:[%s761] sm:$0xf]
      %v765 = vunpack.c.l.b16 %v759
      %v766 = vunpack.c.h.b16 %v759
      %v767 = vunpack.c.l.b16 %v760
      %v768 = vpack.c.b16 %v765, %v765
      %v769 = vpack.c.b16 %v766, %v766
      %v770 = vpack.c.b16 %v767, %v767
      %771 = vrot.lane.b32.xlu0 %v768, 127
      %v772 = vpop.permute.xlu0 %771
      %773 = vrot.lane.b32.xlu0 %v769, 127
      %v774 = vpop.permute.xlu0 %773
      %775 = vrot.lane.b32.xlu0 %v770, 127
      %v776 = vpop.permute.xlu0 %775
      %v777 = vsel %vm614, %v772, %v774
      %v778 = vsel %vm614, %v774, %v776
      %v780 = vsel %vm365, %v762, 0
      %v783 = vsel %vm369, %v777, 0
      %v786 = vsel %vm369, %v778, 0
      %788 = vmatprep.subr.bf16.mxu0 %v786
      %789 = vmatpush1.bf16.msra.mxu0 %v783
      %790 = vmatprep.subr.bf16.mxu0 0
      %791 = vmatpush1.bf16.msra.mxu0 0
      %792 = vmatprep.subr.bf16.mxu0 0
      %793 = vmatpush1.bf16.msra.mxu0 0
      %794 = vmatprep.subr.bf16.mxu0 0
      %795 = vmatpush1.bf16.msra.mxu0 0
      %796 = vmatprep.subr.bf16.mxu0 0
      %797 = vmatpush1.bf16.msra.mxu0 0
      %798 = vmatprep.subr.bf16.mxu0 0
      %799 = vmatpush1.bf16.msra.mxu0 0
      %800 = vmatprep.subr.bf16.mxu0 0
      %801 = vmatpush1.bf16.msra.mxu0 0
      %802 = vmatprep.subr.bf16.mxu0 0
      %803 = vmatpush1.bf16.msra.mxu0 0
      %804 = vmatprep.subr.bf16.mxu0 0
      %805 = vmatpush1.bf16.msra.mxu0 0
      %806 = vmatprep.subr.bf16.mxu0 0
      %807 = vmatpush1.bf16.msra.mxu0 0
      %808 = vmatprep.subr.bf16.mxu0 0
      %809 = vmatpush1.bf16.msra.mxu0 0
      %810 = vmatprep.subr.bf16.mxu0 0
      %811 = vmatpush1.bf16.msra.mxu0 0
      %812 = vmatprep.subr.bf16.mxu0 0
      %813 = vmatpush1.bf16.msra.mxu0 0
      %814 = vmatprep.subr.bf16.mxu0 0
      %815 = vmatpush1.bf16.msra.mxu0 0
      %816 = vmatprep.subr.bf16.mxu0 0
      %817 = vmatpush1.bf16.msra.mxu0 0
      %818 = vmatprep.subr.bf16.mxu0 0
      %819 = vmatpush1.bf16.msra.mxu0 0
      %820 = vmatprep.mubr.bf16.mxu0 0
      %821 = vmatmul.mubr.bf16.gmra.mrb[0].mxu0 %v780
      %v822 = vpop.f32.mrb[0].mxu0
      %v823 = vadd.f32 0.0, %v822
      %v824 = vpop.f32.mrb[0].mxu0
      %v825 = vadd.f32 0.0, %v824
      %v826 = vpop.f32.mrb[0].mxu0
      %v827 = vpop.f32.mrb[0].mxu0
      %828 = vdwg.mxu0
      %v829 = vadd.f32 %v749, %v823
      %v830 = vadd.f32 %v750, %v825
      %831 = vrot.lane.b32.xlu0 %v335, 15
      %v832 = vpop.permute.xlu0 %831
      %v833 = vrot.slane %v832, 4
      %v834 = vsel %vm554, %v833, %v832
      %v837 = vmul.bf16 %v751, %v834
      %v838 = vmul.bf16 %v752, %v833
      %s839 = scalar_lea.vmem %s280, 24
      %v840 = vld [vmem:[%s839] sm:$0xf]
      %v843 = vunpack.c.l.b16 %v837
      %v844 = vunpack.c.h.b16 %v837
      %v845 = vunpack.c.l.b16 %v838
      %v846 = vpack.c.b16 %v843, %v843
      %v847 = vpack.c.b16 %v844, %v844
      %v848 = vpack.c.b16 %v845, %v845
      %849 = vrot.lane.b32.xlu0 %v846, 113
      %v850 = vpop.permute.xlu0 %849
      %851 = vrot.lane.b32.xlu0 %v847, 113
      %v852 = vpop.permute.xlu0 %851
      %853 = vrot.lane.b32.xlu0 %v848, 113
      %v854 = vpop.permute.xlu0 %853
      %v855 = vsel %vm532, %v850, %v852
      %v856 = vsel %vm532, %v852, %v854
      %v858 = vsel %vm365, %v840, 0
      %v861 = vsel %vm369, %v855, 0
      %v864 = vsel %vm369, %v856, 0
      %866 = vmatprep.subr.bf16.mxu0 %v864
      %867 = vmatpush1.bf16.msra.mxu0 %v861
      %868 = vmatprep.subr.bf16.mxu0 0
      %869 = vmatpush1.bf16.msra.mxu0 0
      %870 = vmatprep.subr.bf16.mxu0 0
      %871 = vmatpush1.bf16.msra.mxu0 0
      %872 = vmatprep.subr.bf16.mxu0 0
      %873 = vmatpush1.bf16.msra.mxu0 0
      %874 = vmatprep.subr.bf16.mxu0 0
      %875 = vmatpush1.bf16.msra.mxu0 0
      %876 = vmatprep.subr.bf16.mxu0 0
      %877 = vmatpush1.bf16.msra.mxu0 0
      %878 = vmatprep.subr.bf16.mxu0 0
      %879 = vmatpush1.bf16.msra.mxu0 0
      %880 = vmatprep.subr.bf16.mxu0 0
      %881 = vmatpush1.bf16.msra.mxu0 0
      %882 = vmatprep.subr.bf16.mxu0 0
      %883 = vmatpush1.bf16.msra.mxu0 0
      %884 = vmatprep.subr.bf16.mxu0 0
      %885 = vmatpush1.bf16.msra.mxu0 0
      %886 = vmatprep.subr.bf16.mxu0 0
      %887 = vmatpush1.bf16.msra.mxu0 0
      %888 = vmatprep.subr.bf16.mxu0 0
      %889 = vmatpush1.bf16.msra.mxu0 0
      %890 = vmatprep.subr.bf16.mxu0 0
      %891 = vmatpush1.bf16.msra.mxu0 0
      %892 = vmatprep.subr.bf16.mxu0 0
      %893 = vmatpush1.bf16.msra.mxu0 0
      %894 = vmatprep.subr.bf16.mxu0 0
      %895 = vmatpush1.bf16.msra.mxu0 0
      %896 = vmatprep.subr.bf16.mxu0 0
      %897 = vmatpush1.bf16.msra.mxu0 0
      %898 = vmatprep.mubr.bf16.mxu0 0
      %899 = vmatmul.mubr.bf16.gmra.mrb[0].mxu0 %v858
      %v900 = vpop.f32.mrb[0].mxu0
      %v901 = vadd.f32 0.0, %v900
      %v902 = vpop.f32.mrb[0].mxu0
      %v903 = vadd.f32 0.0, %v902
      %v904 = vpop.f32.mrb[0].mxu0
      %v905 = vpop.f32.mrb[0].mxu0
      %906 = vdwg.mxu0
      %v907 = vadd.f32 %v829, %v901
      %v908 = vadd.f32 %v830, %v903
      %s909 = scalar_lea.vmem %s280, 28
      %v910 = vld [vmem:[%s909] sm:$0xf]
      %v913 = vunpack.c.l.b16 %v751
      %v914 = vunpack.c.h.b16 %v751
      %v915 = vunpack.c.l.b16 %v752
      %v916 = vpack.c.b16 %v913, %v913
      %v917 = vpack.c.b16 %v914, %v914
      %v918 = vpack.c.b16 %v915, %v915
      %919 = vrot.lane.b32.xlu0 %v916, 112
      %v920 = vpop.permute.xlu0 %919
      %921 = vrot.lane.b32.xlu0 %v917, 112
      %v922 = vpop.permute.xlu0 %921
      %923 = vrot.lane.b32.xlu0 %v918, 112
      %v924 = vpop.permute.xlu0 %923
      %vm925 = vcmask 916480
      %v926 = vsel %vm925, %v920, %v922
      %v927 = vsel %vm925, %v922, %v924
      %v929 = vsel %vm365, %v910, 0
      %v932 = vsel %vm369, %v926, 0
      %v935 = vsel %vm369, %v927, 0
      %937 = vmatprep.subr.bf16.mxu0 %v935
      %938 = vmatpush1.bf16.msra.mxu0 %v932
      %939 = vmatprep.subr.bf16.mxu0 0
      %940 = vmatpush1.bf16.msra.mxu0 0
      %941 = vmatprep.subr.bf16.mxu0 0
      %942 = vmatpush1.bf16.msra.mxu0 0
      %943 = vmatprep.subr.bf16.mxu0 0
      %944 = vmatpush1.bf16.msra.mxu0 0
      %945 = vmatprep.subr.bf16.mxu0 0
      %946 = vmatpush1.bf16.msra.mxu0 0
      %947 = vmatprep.subr.bf16.mxu0 0
      %948 = vmatpush1.bf16.msra.mxu0 0
      %949 = vmatprep.subr.bf16.mxu0 0
      %950 = vmatpush1.bf16.msra.mxu0 0
      %951 = vmatprep.subr.bf16.mxu0 0
      %952 = vmatpush1.bf16.msra.mxu0 0
      %953 = vmatprep.subr.bf16.mxu0 0
      %954 = vmatpush1.bf16.msra.mxu0 0
      %955 = vmatprep.subr.bf16.mxu0 0
      %956 = vmatpush1.bf16.msra.mxu0 0
      %957 = vmatprep.subr.bf16.mxu0 0
      %958 = vmatpush1.bf16.msra.mxu0 0
      %959 = vmatprep.subr.bf16.mxu0 0
      %960 = vmatpush1.bf16.msra.mxu0 0
      %961 = vmatprep.subr.bf16.mxu0 0
      %962 = vmatpush1.bf16.msra.mxu0 0
      %963 = vmatprep.subr.bf16.mxu0 0
      %964 = vmatpush1.bf16.msra.mxu0 0
      %965 = vmatprep.subr.bf16.mxu0 0
      %966 = vmatpush1.bf16.msra.mxu0 0
      %967 = vmatprep.subr.bf16.mxu0 0
      %968 = vmatpush1.bf16.msra.mxu0 0
      %969 = vmatprep.mubr.bf16.mxu0 0
      %970 = vmatmul.mubr.bf16.gmra.mrb[0].mxu0 %v929
      %v971 = vpop.f32.mrb[0].mxu0
      %v972 = vadd.f32 0.0, %v971
      %v973 = vpop.f32.mrb[0].mxu0
      %v974 = vadd.f32 0.0, %v973
      %v975 = vpop.f32.mrb[0].mxu0
      %v976 = vpop.f32.mrb[0].mxu0
      %977 = vdwg.mxu0
      %v978 = vadd.f32 %v907, %v972
      %v979 = vadd.f32 %v908, %v974
      %980 = vrot.lane.b32.xlu0 %v528, 17
      %v981 = vpop.permute.xlu0 %980
      %v982 = vrot.slane %v981, 4
      %v983 = vsel %vm431, %v982, %v981
      %v986 = vmul.bf16 %v751, %v983
      %v987 = vmul.bf16 %v752, %v982
      %s988 = scalar_lea.vmem %s280, 32
      %v989 = vld [vmem:[%s988] sm:$0xf]
      %v992 = vunpack.c.l.b16 %v986
      %v993 = vunpack.c.h.b16 %v986
      %v994 = vunpack.c.l.b16 %v987
      %v995 = vpack.c.b16 %v992, %v992
      %v996 = vpack.c.b16 %v993, %v993
      %v997 = vpack.c.b16 %v994, %v994
      %998 = vrot.lane.b32.xlu0 %v995, 111
      %v999 = vpop.permute.xlu0 %998
      %1000 = vrot.lane.b32.xlu0 %v996, 111
      %v1001 = vpop.permute.xlu0 %1000
      %1002 = vrot.lane.b32.xlu0 %v997, 111
      %v1003 = vpop.permute.xlu0 %1002
      %v1004 = vsel %vm339, %v999, %v1001
      %v1005 = vsel %vm339, %v1001, %v1003
      %v1007 = vsel %vm365, %v989, 0
      %v1010 = vsel %vm369, %v1004, 0
      %v1013 = vsel %vm369, %v1005, 0
      %1015 = vmatprep.subr.bf16.mxu0 %v1013
      %1016 = vmatpush1.bf16.msra.mxu0 %v1010
      %1017 = vmatprep.subr.bf16.mxu0 0
      %1018 = vmatpush1.bf16.msra.mxu0 0
      %1019 = vmatprep.subr.bf16.mxu0 0
      %1020 = vmatpush1.bf16.msra.mxu0 0
      %1021 = vmatprep.subr.bf16.mxu0 0
      %1022 = vmatpush1.bf16.msra.mxu0 0
      %1023 = vmatprep.subr.bf16.mxu0 0
      %1024 = vmatpush1.bf16.msra.mxu0 0
      %1025 = vmatprep.subr.bf16.mxu0 0
      %1026 = vmatpush1.bf16.msra.mxu0 0
      %1027 = vmatprep.subr.bf16.mxu0 0
      %1028 = vmatpush1.bf16.msra.mxu0 0
      %1029 = vmatprep.subr.bf16.mxu0 0
      %1030 = vmatpush1.bf16.msra.mxu0 0
      %1031 = vmatprep.subr.bf16.mxu0 0
      %1032 = vmatpush1.bf16.msra.mxu0 0
      %1033 = vmatprep.subr.bf16.mxu0 0
      %1034 = vmatpush1.bf16.msra.mxu0 0
      %1035 = vmatprep.subr.bf16.mxu0 0
      %1036 = vmatpush1.bf16.msra.mxu0 0
      %1037 = vmatprep.subr.bf16.mxu0 0
      %1038 = vmatpush1.bf16.msra.mxu0 0
      %1039 = vmatprep.subr.bf16.mxu0 0
      %1040 = vmatpush1.bf16.msra.mxu0 0
      %1041 = vmatprep.subr.bf16.mxu0 0
      %1042 = vmatpush1.bf16.msra.mxu0 0
      %1043 = vmatprep.subr.bf16.mxu0 0
      %1044 = vmatpush1.bf16.msra.mxu0 0
      %1045 = vmatprep.subr.bf16.mxu0 0
      %1046 = vmatpush1.bf16.msra.mxu0 0
      %1047 = vmatprep.mubr.bf16.mxu0 0
      %1048 = vmatmul.mubr.bf16.gmra.mrb[0].mxu0 %v1007
      %v1049 = vpop.f32.mrb[0].mxu0
      %v1050 = vadd.f32 0.0, %v1049
      %v1051 = vpop.f32.mrb[0].mxu0
      %v1052 = vadd.f32 0.0, %v1051
      %v1053 = vpop.f32.mrb[0].mxu0
      %v1054 = vpop.f32.mrb[0].mxu0
      %1055 = vdwg.mxu0
      %v1056 = vadd.f32 %v978, %v1050
      %v1057 = vadd.f32 %v979, %v1052
      %s1058 = sld [smem:[#allocation2]]
      %v1059 = vld [vmem:[%s284] sm:$0x3]
      %v1060 = vstv %s1058
      %v1061 = vmul.f32 %v1060, %v1059
      %v1063 = vlaneseq
      %v1064 = vshrl.u32 %v1063, 7
      %v1065 = vsub.s32 0, %v1064
      %v1066 = vrot.slane %v1061, %v1065
      %v1067 = vlaneseq
      %v1068 = vshrl.u32 %v1067, 7
      %v1069 = vsub.s32 1, %v1068
      %v1070 = vrot.slane %v1061, %v1069
      %v1073 = vadd.f32 %v1056, %v1066
      %v1074 = vadd.f32 %v1057, %v1070
      %v1075 = vld [vmem:[%s5] sm:$0xff]
      %1077 = vset.pattern.permute.xlu0 0
      %1078 = vperm.xlu0 %1077, %v1075
      %v1079 = vpop.permute.xlu0 %1078
      %v1081 = vadd.f32 %v1073, %v1079
      %v1082 = vadd.f32 %v1074, %v1079
      %vm1083 = vcmp.ge.f32.partialorder %v1081, 0.0
      %vm1084 = vcmp.ge.f32.partialorder %v1082, 0.0
      %v1085 = vmul.f32 %v1081, 0.2
      %v1086 = vmul.f32 %v1082, 0.2
      %v1087 = vsel %vm1083, %v1081, %v1085
      %v1088 = vsel %vm1084, %v1082, %v1086
      %1089 = vst [vmem:[%s289] sm:$0xff] %v1087
      %1090 = vst [vmem:[%s289 + $0x8] sm:$0xff] %v1088
      %p1091 = scmp.lt.s32.totalorder %s18, 1
      %s1092 = scalar_select %p1091, %s18, 1
      %s1093 = smul.addr %s1092, 2
      %s1094 = smul.addr %s1093, 8
      %s1095 = scalar_lea.vmem %s6, %s1094
      // Predicated region
      $region45: #{style_block_apply.1} parent=43 // pred_check
        %p1096 = pneg %p177
      $region46: #{style_block_apply.1} parent=43 // pred_check_branch
        %1098 = sbr.rel (%p1096) target = $region48
      $region47: #{style_block_apply.1} parent=43 // pred_region
        _
      $region48: #{style_block_apply.1} parent=43 // pred_fallthru
        _
    $region44: #{style_block_apply.1} parent=5 // pred_fallthru
      _
    %p1099 = scmp.le.s32.totalorder 2, %s13
    // Predicated region
    $region49: #{style_block_apply.1} parent=5 // pred_check
      %p1100 = pneg %p1099
    $region50: #{style_block_apply.1} parent=5 // pred_check_branch
      %1102 = sbr.rel (%p1100) target = $region52
    $region51: #{style_block_apply.1} parent=5 // pred_region
      %s1103 = ssub.s32 %s13, 2
      // Predicated region
      $region53: #{style_block_apply.1} parent=51 // pred_check
        %p1104 = pneg %p183
      $region54: #{style_block_apply.1} parent=51 // pred_check_branch
        %1106 = sbr.rel (%p1104) target = $region56
      $region55: #{style_block_apply.1} parent=51 // pred_region
        %p1107 = scmp.lt.s32.totalorder %s19, 1
        %s1108 = scalar_select %p1107, %s19, 1
        %s1109 = smul.addr %s1108, 2
        %s1110 = smul.addr %s1109, 8
        %s1111 = scalar_lea.vmem %s6, %s1110
      $region56: #{style_block_apply.1} parent=51 // pred_fallthru
        _
    $region52: #{style_block_apply.1} parent=5 // pred_fallthru
      _
  $region6: #{style_block_apply.1} parent=0 // loop_footer
    %s17 = sadd.s32 1, %s13
  $region7: #{style_block_apply.1} parent=0 // loop_footer_branch
    %12 = sbr.rel target = $region3
  $region8: #{style_block_apply.1} parent=0 // loop_exit
    _

</llo_original>
